<compile_context>
chip_gen: v6e
topology: v6e:2x2x1
jax: 0.10.0
libtpu: 0.0.40
codegen_flags: <defaults>
</compile_context>

<pallas_src>
import jax
import jax.numpy as jnp
from jax.experimental import pallas as pl
from jax.experimental.pallas import tpu as pltpu


def _context_gating_kernel(x_ref, w_ref, b_ref, o_ref):
    tn = o_ref.shape[-1]
    x = x_ref[...]                                      # (tb, D): full contraction dim
    # Gating linear: (tb, D) @ (D, tn) + (1, tn); MXU matmul, f32 accumulation.
    g = jnp.dot(x.astype(w_ref.dtype), w_ref[...],
                preferred_element_type=jnp.float32)
    g = g + b_ref[...].astype(jnp.float32)
    # Column slice of x matching this output tile (lane aligned: tn % 128 == 0).
    if tn == x_ref.shape[-1]:
        xg = x
    else:
        col0 = pl.multiple_of(pl.program_id(1) * tn, tn)
        xg = x_ref[:, pl.ds(col0, tn)]
    # GLU(cat([x, fc(x)], 1), 1) == x * sigmoid(fc(x)).  Epilogue in x's dtype:
    # bf16 on v6e/v7x halves VALU work + store traffic; f32 stays exact f32.
    o_ref[...] = (xg * jax.nn.sigmoid(g).astype(xg.dtype)).astype(o_ref.dtype)


def _vmem_capacity_bytes():
    try:
        return int(pltpu.get_tpu_info().vmem_capacity_bytes)
    except Exception:
        return 64 * 1024 * 1024          # conservative: v7x per-TensorCore VMEM


def _pick_block_n(D, w_itemsize, vmem_cap):
    """Full-D resident weight when it fits comfortably, else a lane-aligned N tile."""
    budget = int(0.4 * vmem_cap)
    if D * D * w_itemsize <= budget:
        return D
    for tn in (1024, 896, 768, 640, 512, 384, 256, 128):
        if tn < D and D % tn == 0 and 2 * D * tn * w_itemsize <= budget:
            return tn
    return D                              # D not 128-tileable: keep weight resident


def _pick_block_b(B, sublane):
    # MXU-sized production default (>=128, ideally multiples of 256 on v6e/v7x);
    # when B is large enough, leave >=4 batch tiles (2 per v7x TensorCore) so
    # dimension_semantics="parallel" can actually shard across cores.
    block_b = 512
    if B // block_b < 4 and B >= 4 * 128:
        block_b = max(128, (B // 4) // 128 * 128)
    block_b = min(block_b, B)
    return max(sublane, -(-block_b // sublane) * sublane)


def context_gating(x, w, b, *, block_b=None, block_n=None, donate_x=False):
    """Context gating: out = x * sigmoid(x @ w + b).

    x: (B, D);  w: (D, D) pre-transposed;  b: (1, D).
    block_b / block_n override the batch / output-column tile sizes.  Small
    values like block_b=16 are TEST-ONLY (they waste the MXU); production runs
    should keep the defaults (>=128, MXU-sized).
    Set donate_x=True to alias the output onto x (input_output_aliases={0: 0})
    when the caller can discard x.
    """
    B, D = x.shape
    assert w.shape == (D, D), w.shape
    assert b.shape == (1, D), b.shape

    vmem_cap = _vmem_capacity_bytes()
    sublane = 16 if x.dtype.itemsize == 2 else 8

    if block_b is None:
        block_b = _pick_block_b(B, sublane)
    block_b = min(block_b, B)
    block_b = max(sublane, -(-block_b // sublane) * sublane)

    if block_n is None:
        block_n = _pick_block_n(D, w.dtype.itemsize, vmem_cap)
    assert block_n == D or (D % block_n == 0 and block_n % 128 == 0), (
        "block_n must equal D or be a 128-multiple divisor of D")

    grid = (pl.cdiv(B, block_b), D // block_n)
    w_resident = (block_n == D)           # constant index_map -> single-buffer it

    # Derived VMEM budget: double-buffered x/out tiles, weight/bias buffers, plus
    # headroom for Mosaic internal scratch; clamped to ~85% of physical VMEM.
    itemsize = x.dtype.itemsize
    w_bufs = 1 if w_resident else 2
    needed = (2 * block_b * D * itemsize                       # x tiles
              + 2 * block_b * block_n * itemsize               # out tiles
              + w_bufs * D * block_n * w.dtype.itemsize        # weight
              + 2 * 8 * block_n * b.dtype.itemsize)            # bias (padded rows)
    vmem_limit = max(needed + needed // 4 + (2 << 20), 16 << 20)
    vmem_limit = min(vmem_limit, int(0.85 * vmem_cap))

    w_reads = 1 if w_resident else grid[0]                     # W re-read per batch tile
    cost = pl.CostEstimate(
        flops=2 * B * D * D + 2 * B * D,                       # matmul + bias + gate mul
        transcendentals=B * D,                                 # sigmoid
        bytes_accessed=(x.size * x.dtype.itemsize
                        + w_reads * w.size * w.dtype.itemsize
                        + b.size * b.dtype.itemsize
                        + B * D * x.dtype.itemsize),
    )

    def build(single_buffer_resident):
        if single_buffer_resident:
            w_spec = pl.BlockSpec((D, block_n), lambda i, j: (0, j),
                                  pipeline_mode=pl.Buffered(1))
            b_spec = pl.BlockSpec((1, block_n), lambda i, j: (0, j),
                                  pipeline_mode=pl.Buffered(1))
        else:
            w_spec = pl.BlockSpec((D, block_n), lambda i, j: (0, j))
            b_spec = pl.BlockSpec((1, block_n), lambda i, j: (0, j))
        kwargs = {}
        if donate_x:
            kwargs["input_output_aliases"] = {0: 0}
        return pl.pallas_call(
            _context_gating_kernel,
            out_shape=jax.ShapeDtypeStruct((B, D), x.dtype),
            grid_spec=pltpu.PrefetchScalarGridSpec(
                num_scalar_prefetch=0,
                grid=grid,
                in_specs=[
                    # x: full contraction dim, j-invariant -> fetched once per batch tile.
                    pl.BlockSpec((block_b, D), lambda i, j: (i, 0)),
                    w_spec,
                    b_spec,
                ],
                out_specs=pl.BlockSpec((block_b, block_n), lambda i, j: (i, j)),
            ),
            compiler_params=pltpu.CompilerParams(
                dimension_semantics=("parallel", "parallel"),
                vmem_limit_bytes=int(vmem_limit),
            ),
            cost_estimate=cost,
            **kwargs,
        )

    if w_resident:
        try:
            return build(True)(x, w, b)
        except Exception:
            # Graceful degradation if pipeline_mode=pl.Buffered(1) is not honored
            # by this jax build: default double-buffered resident weight (correct,
            # just uses 2x weight VMEM).
            pass
    return build(False)(x, w, b)


def _torch_linear_init(key, dim):
    """Deterministic init mimicking nn.Linear default (uniform +/- 1/sqrt(fan_in))."""
    kw, kb = jax.random.split(key)
    bound = 1.0 / jnp.sqrt(dim)
    w = jax.random.uniform(kw, (dim, dim), jnp.float32, -bound, bound)  # pre-transposed
    b = jax.random.uniform(kb, (1, dim), jnp.float32, -bound, bound)
    return w, b


if __name__ == "__main__":
    root = jax.random.PRNGKey(0)
    k1, k2, k3, k4 = jax.random.split(root, 4)

    # --- Test 1: f32, D=128 (resident weight, single-buffered), multi-step batch grid.
    #     NOTE: block_b=16 is test-only; production uses the MXU-sized default. ---
    B, D = 32, 128
    x = jax.random.normal(k1, (B, D), jnp.float32)
    w, b = _torch_linear_init(k2, D)
    out = jax.block_until_ready(context_gating(x, w, b, block_b=16))
    ref = x * jax.nn.sigmoid(x @ w + b)
    assert jnp.allclose(out, ref, atol=1e-5, rtol=1e-5), "f32 mismatch vs reference"

    # --- Test 2: f32, D=256 with explicit N-tiling (block_n=128) -> 2x2 grid,
    #     exercising the j-invariant x fetch and the in-kernel column slice. ---
    B2, D2 = 32, 256
    x2 = jax.random.normal(k3, (B2, D2), jnp.float32)
    w2, b2 = _torch_linear_init(k4, D2)
    out2 = jax.block_until_ready(context_gating(x2, w2, b2, block_b=16, block_n=128))
    ref2 = x2 * jax.nn.sigmoid(x2 @ w2 + b2)
    assert jnp.allclose(out2, ref2, atol=1e-4, rtol=1e-4), "N-tiled mismatch vs reference"

    # --- Test 3: bf16 fast-MXU path with bf16 epilogue (f32 accumulation inside). ---
    x_bf = x.astype(jnp.bfloat16)
    w_bf = w.astype(jnp.bfloat16)
    b_bf = b.astype(jnp.bfloat16)
    out_bf = jax.block_until_ready(context_gating(x_bf, w_bf, b_bf, block_b=16))
    xf = x_bf.astype(jnp.float32)
    gf = xf @ w_bf.astype(jnp.float32) + b_bf.astype(jnp.float32)
    ref_bf = xf * jax.nn.sigmoid(gf)
    assert jnp.allclose(out_bf.astype(jnp.float32), ref_bf, atol=5e-2, rtol=5e-2), \
        "bf16 mismatch vs reference"

    print("KERNEL_OK")
</pallas_src>

<mosaic_0001>
module attributes {stable_mosaic.version = 11 : i64} {
  func.func @_context_gating_kernel(%arg0: i32, %arg1: i32, %arg2: memref<16x128xf32, #tpu.memory_space<vmem>>, %arg3: memref<128x128xf32, #tpu.memory_space<vmem>>, %arg4: memref<1x128xf32, #tpu.memory_space<vmem>>, %arg5: memref<16x128xf32, #tpu.memory_space<vmem>>) attributes {dimension_semantics = [#tpu.dimension_semantics<parallel>, #tpu.dimension_semantics<parallel>], iteration_bounds = array<i64: 2, 1>, scalar_prefetch = 0 : i64, scratch_operands = 0 : i64, tpu.core_type = #tpu.core_type<tc>, window_params = [{transform_indices = @transform_0, window_bounds = array<i64: 16, 128>}, {pipeline_mode = #tpu.pipeline_mode<synchronous>, transform_indices = @transform_1, window_bounds = array<i64: 128, 128>}, {pipeline_mode = #tpu.pipeline_mode<synchronous>, transform_indices = @transform_2, window_bounds = array<i64: 1, 128>}, {transform_indices = @transform_3, window_bounds = array<i64: 16, 128>}]} {
    %c0 = arith.constant 0 : index
    %c0_0 = arith.constant 0 : index
    %0 = vector.load %arg2[%c0, %c0_0] : memref<16x128xf32, #tpu.memory_space<vmem>>, vector<16x128xf32>
    %c0_1 = arith.constant 0 : index
    %c0_2 = arith.constant 0 : index
    %1 = vector.load %arg3[%c0_1, %c0_2] : memref<128x128xf32, #tpu.memory_space<vmem>>, vector<128x128xf32>
    %cst = arith.constant dense<0.000000e+00> : vector<16x128xf32>
    %2 = tpu.matmul %0, %1, %cst {dimension_numbers = #tpu.dot_dimension_numbers<[1], [0], [0], [1], [0, 0, 1, 1], [], []>} : vector<16x128xf32>, vector<128x128xf32>, vector<16x128xf32> -> vector<16x128xf32>
    %c0_3 = arith.constant 0 : index
    %c0_4 = arith.constant 0 : index
    %3 = vector.load %arg4[%c0_3, %c0_4] : memref<1x128xf32, #tpu.memory_space<vmem>>, vector<1x128xf32>
    %4 = vector.broadcast %3 : vector<1x128xf32> to vector<16x128xf32>
    %5 = arith.addf %2, %4 : vector<16x128xf32>
    %6 = arith.negf %5 : vector<16x128xf32>
    %7 = math.exp %6 : vector<16x128xf32>
    %cst_5 = arith.constant 1.000000e+00 : f32
    %8 = vector.broadcast %cst_5 : f32 to vector<16x128xf32>
    %9 = arith.addf %8, %7 : vector<16x128xf32>
    %10 = arith.divf %8, %9 : vector<16x128xf32>
    %11 = arith.mulf %0, %10 : vector<16x128xf32>
    %c0_6 = arith.constant 0 : index
    %c0_7 = arith.constant 0 : index
    %12 = vector.load %arg5[%c0_6, %c0_7] : memref<16x128xf32, #tpu.memory_space<vmem>>, vector<16x128xf32>
    tpu.vector_store %arg5[%c0_6, %c0_7], %11 {strides = array<i32>} : memref<16x128xf32, #tpu.memory_space<vmem>>, vector<16x128xf32>,
    return
  }
  func.func @transform_0(%arg0: i32, %arg1: i32) -> (i32, i32) {
    %c0_i32 = arith.constant 0 : i32
    %c0_i32_0 = arith.constant 0 : i32
    return %arg0, %c0_i32 : i32, i32
  }
  func.func @transform_1(%arg0: i32, %arg1: i32) -> (i32, i32) {
    %c0_i32 = arith.constant 0 : i32
    %c0_i32_0 = arith.constant 0 : i32
    return %c0_i32, %arg1 : i32, i32
  }
  func.func @transform_2(%arg0: i32, %arg1: i32) -> (i32, i32) {
    %c0_i32 = arith.constant 0 : i32
    %c0_i32_0 = arith.constant 0 : i32
    return %c0_i32, %arg1 : i32, i32
  }
  func.func @transform_3(%arg0: i32, %arg1: i32) -> (i32, i32) {
    %c0_i32 = arith.constant 0 : i32
    return %arg0, %arg1 : i32, i32
  }
}

module attributes {stable_mosaic.version = 11 : i64} {
  func.func @_context_gating_kernel(%arg0: i32, %arg1: i32, %arg2: memref<16x128xf32, #tpu.memory_space<vmem>>, %arg3: memref<128x128xf32, #tpu.memory_space<vmem>>, %arg4: memref<1x128xf32, #tpu.memory_space<vmem>>, %arg5: memref<16x128xf32, #tpu.memory_space<vmem>>) attributes {dimension_semantics = [#tpu.dimension_semantics<parallel>, #tpu.dimension_semantics<parallel>], iteration_bounds = array<i64: 2, 1>, scalar_prefetch = 0 : i64, scratch_operands = 0 : i64, tpu.core_type = #tpu.core_type<tc>, window_params = [{transform_indices = @transform_0, window_bounds = array<i64: 16, 128>}, {transform_indices = @transform_1, window_bounds = array<i64: 128, 128>}, {transform_indices = @transform_2, window_bounds = array<i64: 1, 128>}, {transform_indices = @transform_3, window_bounds = array<i64: 16, 128>}]} {
    %c0 = arith.constant 0 : index
    %c0_0 = arith.constant 0 : index
    %0 = vector.load %arg2[%c0, %c0_0] : memref<16x128xf32, #tpu.memory_space<vmem>>, vector<16x128xf32>
    %c0_1 = arith.constant 0 : index
    %c0_2 = arith.constant 0 : index
    %1 = vector.load %arg3[%c0_1, %c0_2] : memref<128x128xf32, #tpu.memory_space<vmem>>, vector<128x128xf32>
    %cst = arith.constant dense<0.000000e+00> : vector<16x128xf32>
    %2 = tpu.matmul %0, %1, %cst {dimension_numbers = #tpu.dot_dimension_numbers<[1], [0], [0], [1], [0, 0, 1, 1], [], []>} : vector<16x128xf32>, vector<128x128xf32>, vector<16x128xf32> -> vector<16x128xf32>
    %c0_3 = arith.constant 0 : index
    %c0_4 = arith.constant 0 : index
    %3 = vector.load %arg4[%c0_3, %c0_4] : memref<1x128xf32, #tpu.memory_space<vmem>>, vector<1x128xf32>
    %4 = vector.broadcast %3 : vector<1x128xf32> to vector<16x128xf32>
    %5 = arith.addf %2, %4 : vector<16x128xf32>
    %6 = arith.negf %5 : vector<16x128xf32>
    %7 = math.exp %6 : vector<16x128xf32>
    %cst_5 = arith.constant 1.000000e+00 : f32
    %8 = vector.broadcast %cst_5 : f32 to vector<16x128xf32>
    %9 = arith.addf %8, %7 : vector<16x128xf32>
    %10 = arith.divf %8, %9 : vector<16x128xf32>
    %11 = arith.mulf %0, %10 : vector<16x128xf32>
    %c0_6 = arith.constant 0 : index
    %c0_7 = arith.constant 0 : index
    %12 = vector.load %arg5[%c0_6, %c0_7] : memref<16x128xf32, #tpu.memory_space<vmem>>, vector<16x128xf32>
    tpu.vector_store %arg5[%c0_6, %c0_7], %11 {strides = array<i32>} : memref<16x128xf32, #tpu.memory_space<vmem>>, vector<16x128xf32>,
    return
  }
  func.func @transform_0(%arg0: i32, %arg1: i32) -> (i32, i32) {
    %c0_i32 = arith.constant 0 : i32
    %c0_i32_0 = arith.constant 0 : i32
    return %arg0, %c0_i32 : i32, i32
  }
  func.func @transform_1(%arg0: i32, %arg1: i32) -> (i32, i32) {
    %c0_i32 = arith.constant 0 : i32
    %c0_i32_0 = arith.constant 0 : i32
    return %c0_i32, %arg1 : i32, i32
  }
  func.func @transform_2(%arg0: i32, %arg1: i32) -> (i32, i32) {
    %c0_i32 = arith.constant 0 : i32
    %c0_i32_0 = arith.constant 0 : i32
    return %c0_i32, %arg1 : i32, i32
  }
  func.func @transform_3(%arg0: i32, %arg1: i32) -> (i32, i32) {
    %c0_i32 = arith.constant 0 : i32
    return %arg0, %arg1 : i32, i32
  }
}

</mosaic_0001>

<llo_original>
// kernel: tpu_custom_call.1
$region0: #{tpu_custom_call.1}
  #allocation0 [shape = 'u32[]', space=smem, size = 0x4, offset = 0x4, fixed_abs, tag = 'smem constant byte address 0x4 - core index']
  #allocation1 [shape = 'u32[144,128]{1,0:T(1,128)}', space=vmem, size = 0x12000, scoped, tag = 'internal scratch']
  %s0 = inlined_call_operand.hbm [shape: f32[32,128], index: 0, kind: input, shape index: {}]
  %s1 = inlined_call_operand.hbm [shape: f32[128,128], index: 1, kind: input, shape index: {}]
  %s2 = inlined_call_operand.vmem [shape: f32[1,128], index: 2, kind: input, shape index: {}]
  %s3 = inlined_call_operand.hbm [shape: f32[32,128], index: 3, kind: output, shape index: {}]
  %s4 = sld [smem:[#allocation0]]
  $region53: #{tpu_custom_call.1} parent=0
    _
  %s6 = ssub.s32 1, %s4
  %s7 = scalar_select 0, %s6, %s4
  $region1: #{tpu_custom_call.1} parent=0
    #allocation2 [shape = 'u8[16384]{0}', space=vmem, size = 0x4000, scoped, tag = 'input window, operand 0']
    #allocation3 [shape = 's32[2]{0}', space=sflag, size = 0x8, scoped, tag = 'scoped memory for tpu_custom_call.1']
    #allocation4 [shape = 's32[2]{0}', space=sflag, size = 0x8, scoped, tag = 'scoped memory for tpu_custom_call.1']
    #allocation5 [shape = 'u8[65536]{0}', space=vmem, size = 0x10000, scoped, tag = 'input window, operand 1, single buffered']
    #allocation6 [shape = 's32[1]{0}', space=sflag, size = 0x4, scoped, tag = 'scoped memory for tpu_custom_call.1']
    #allocation7 [shape = 'u8[16384]{0}', space=vmem, size = 0x4000, scoped, tag = 'output window, operand 0']
    %8 = vsyncpa [#allocation3], 0
    %s9 = scalar_lea.sflag [#allocation3], 1
    %10 = vsyncpa %s9, 0
    %11 = vsyncpa [#allocation6], 0
    %12 = vsyncpa [#allocation4], 0
    %s13 = scalar_lea.sflag [#allocation4], 1
    %14 = vsyncpa %s13, 0
    loop: start=0, step=1, limit=4
    $region2: #{tpu_custom_call.1} parent=1 // loop_pre_header
      _
    $region3: #{tpu_custom_call.1} parent=1 // loop_header
      %s16 = sphi 0, %s20
      %p17 = scmp.ge.s32.totalorder %s16, 4
      %s23 = sphi 0, %s35
      %s24 = sphi 0, %s31
      %s25 = sphi 0, %s23
      %s26 = sphi 0, %s24
      %s27 = sphi 0, %s25
      %s28 = sphi 0, %s26
      %s38 = sphi 0, %s40
      %s41 = sphi 0, %s38
      %s42 = sphi 0, %s41
      %s58 = sphi 0, %s42
      %s64 = sphi 0, %s66
      %s67 = sphi 0, %s64
      %s68 = sphi 0, %s67
      %s84 = sphi 0, %s68
      %s90 = sphi 0, %s92
      %s93 = sphi 0, %s90
      %s94 = sphi 0, %s93
      %s110 = sphi 0, %s94
      %s118 = sphi 0, %s120
      %s121 = sphi 0, %s118
      %s122 = sphi 0, %s121
      %s138 = sphi 0, %s122
    $region4: #{tpu_custom_call.1} parent=1 // loop_header_branch
      %19 = sbr.rel (%p17) target = $region8
    $region5: #{tpu_custom_call.1} parent=1 // loop_body
      %s21 = ssub.s32 %s16, 1
      %s22 = ssub.s32 %s16, 2
      %s29 = sadd.s32 1, %s24
      %p30 = scmp.ge.s32.totalorder %s29, 1
      %s31 = scalar_select %p30, 0, %s29
      %s32 = sadd.s32 1, %s23
      %s33 = scalar_select %p30, %s32, %s23
      %p34 = scmp.ge.s32.totalorder %s33, 2
      %s35 = scalar_select %p34, 0, %s33
      %s36 = ssub.s32 %s23, %s35
      %p37 = scmp.eq.s32.totalorder %s36, 0
      %s39 = sadd.s32 %s38, 1
      %s40 = scalar_select %p37, %s38, %s39
      %p43 = pneg %p37
      %p44 = scmp.eq.s32.totalorder %s16, 1
      %p45 = por %p43, %p44
      %p46 = scmp.ne.s32.totalorder %s38, %s41
      %p47 = scmp.eq.s32.totalorder %s16, 0
      %p48 = por %p46, %p47
      %p49 = scmp.ne.s32.totalorder %s38, %s41
      %p50 = scmp.eq.s32.totalorder %s21, 1
      %p51 = por %p49, %p50
      %p52 = scmp.ne.s32.totalorder %s41, %s42
      %p53 = scmp.eq.s32.totalorder %s21, 0
      %p54 = por %p52, %p53
      %p55 = scmp.ne.s32.totalorder %s41, %s42
      %p56 = scmp.eq.s32.totalorder %s22, 1
      %p57 = por %p55, %p56
      %p59 = scmp.ne.s32.totalorder %s42, %s58
      %p60 = scmp.eq.s32.totalorder %s22, 0
      %p61 = por %p59, %p60
      %s62 = ssub.s32 %s24, %s31
      %p63 = scmp.eq.s32.totalorder %s62, 0
      %s65 = sadd.s32 %s64, 1
      %s66 = scalar_select %p63, %s64, %s65
      %p69 = pneg %p63
      %p70 = scmp.eq.s32.totalorder %s16, 1
      %p71 = por %p69, %p70
      %p72 = scmp.ne.s32.totalorder %s64, %s67
      %p73 = scmp.eq.s32.totalorder %s16, 0
      %p74 = por %p72, %p73
      %p75 = scmp.ne.s32.totalorder %s64, %s67
      %p76 = scmp.eq.s32.totalorder %s21, 1
      %p77 = por %p75, %p76
      %p78 = scmp.ne.s32.totalorder %s67, %s68
      %p79 = scmp.eq.s32.totalorder %s21, 0
      %p80 = por %p78, %p79
      %p81 = scmp.ne.s32.totalorder %s67, %s68
      %p82 = scmp.eq.s32.totalorder %s22, 1
      %p83 = por %p81, %p82
      %p85 = scmp.ne.s32.totalorder %s68, %s84
      %p86 = scmp.eq.s32.totalorder %s22, 0
      %p87 = por %p85, %p86
      %s88 = ssub.s32 %s24, %s31
      %p89 = scmp.eq.s32.totalorder %s88, 0
      %s91 = sadd.s32 %s90, 1
      %s92 = scalar_select %p89, %s90, %s91
      %p95 = pneg %p89
      %p96 = scmp.eq.s32.totalorder %s16, 1
      %p97 = por %p95, %p96
      %p98 = scmp.ne.s32.totalorder %s90, %s93
      %p99 = scmp.eq.s32.totalorder %s16, 0
      %p100 = por %p98, %p99
      %p101 = scmp.ne.s32.totalorder %s90, %s93
      %p102 = scmp.eq.s32.totalorder %s21, 1
      %p103 = por %p101, %p102
      %p104 = scmp.ne.s32.totalorder %s93, %s94
      %p105 = scmp.eq.s32.totalorder %s21, 0
      %p106 = por %p104, %p105
      %p107 = scmp.ne.s32.totalorder %s93, %s94
      %p108 = scmp.eq.s32.totalorder %s22, 1
      %p109 = por %p107, %p108
      %p111 = scmp.ne.s32.totalorder %s94, %s110
      %p112 = scmp.eq.s32.totalorder %s22, 0
      %p113 = por %p111, %p112
      %s114 = ssub.s32 %s23, %s35
      %s115 = ssub.s32 %s24, %s31
      %s116 = sor.u32 %s114, %s115
      %p117 = scmp.eq.s32.totalorder %s116, 0
      %s119 = sadd.s32 %s118, 1
      %s120 = scalar_select %p117, %s118, %s119
      %p123 = pneg %p117
      %p124 = scmp.eq.s32.totalorder %s16, 1
      %p125 = por %p123, %p124
      %p126 = scmp.ne.s32.totalorder %s118, %s121
      %p127 = scmp.eq.s32.totalorder %s16, 0
      %p128 = por %p126, %p127
      %p129 = scmp.ne.s32.totalorder %s118, %s121
      %p130 = scmp.eq.s32.totalorder %s21, 1
      %p131 = por %p129, %p130
      %p132 = scmp.ne.s32.totalorder %s121, %s122
      %p133 = scmp.eq.s32.totalorder %s21, 0
      %p134 = por %p132, %p133
      %p135 = scmp.ne.s32.totalorder %s121, %s122
      %p136 = scmp.eq.s32.totalorder %s22, 1
      %p137 = por %p135, %p136
      %p139 = scmp.ne.s32.totalorder %s122, %s138
      %p140 = scmp.eq.s32.totalorder %s22, 0
      %p141 = por %p139, %p140
      %p142 = scmp.le.s32.totalorder 1, %s16
      %p143 = scmp.lt.s32.totalorder %s16, 3
      %p144 = pnand %p142, %p143
      %p145 = pneg %p144
      // Predicated region
      $region9: #{tpu_custom_call.1} parent=5 // pred_check
        _
      $region10: #{tpu_custom_call.1} parent=5 // pred_check_branch
        %147 = sbr.rel (%p144) target = $region12
      $region11: #{tpu_custom_call.1} parent=5 // pred_region
        %s148 = ssub.s32 %s16, 1
        // Predicated region
        $region13: #{tpu_custom_call.1} parent=11 // pred_check
          %p149 = pneg %p80
        $region14: #{tpu_custom_call.1} parent=11 // pred_check_branch
          %151 = sbr.rel (%p149) target = $region16
        $region15: #{tpu_custom_call.1} parent=11 // pred_region
          %s153 = ssub.s32 2048, 2048
          %154 = vsyncadd [#allocation6], %s153
          %s155 = smul.addr %s26, 128
          %s156 = scalar_lea.hbm %s1, %s155
          %s157 = sshll.u32 [#allocation5], 4
          %s158 = int_to_ptr.vmem [resolvable:$true] %s157
          %163 = dma.hbm_to_vmem [thread:$0]  %s156, 2048, %s158, [#allocation6], 128, 128, 8
        $region16: #{tpu_custom_call.1} parent=11 // pred_fallthru
          _
        // Predicated region
        $region17: #{tpu_custom_call.1} parent=11 // pred_check
          %p164 = pneg %p106
        $region18: #{tpu_custom_call.1} parent=11 // pred_check_branch
          %166 = sbr.rel (%p164) target = $region20
        $region19: #{tpu_custom_call.1} parent=11 // pred_region
          %p167 = scmp.lt.s32.totalorder %s26, 0
          %s168 = scalar_select %p167, %s26, 0
          %s169 = scalar_lea.vmem %s2, %s168
        $region20: #{tpu_custom_call.1} parent=11 // pred_fallthru
          _
      $region12: #{tpu_custom_call.1} parent=5 // pred_fallthru
        _
      %p170 = scmp.lt.s32.totalorder %s16, 2
      // Predicated region
      $region21: #{tpu_custom_call.1} parent=5 // pred_check
        %p171 = pneg %p170
      $region22: #{tpu_custom_call.1} parent=5 // pred_check_branch
        %173 = sbr.rel (%p171) target = $region24
      $region23: #{tpu_custom_call.1} parent=5 // pred_region
        // Predicated region
        $region25: #{tpu_custom_call.1} parent=23 // pred_check
          %p174 = pneg %p48
        $region26: #{tpu_custom_call.1} parent=23 // pred_check_branch
          %176 = sbr.rel (%p174) target = $region28
        $region27: #{tpu_custom_call.1} parent=23 // pred_region
          %s177 = sand.u32 %s38, 1
          %s178 = scalar_lea.sflag [#allocation3], %s177
          %s179 = sand.u32 %s38, 1
          %s180 = smul.addr %s179, 16
          %s181 = scalar_lea.vmem [#allocation2], %s180
          %s182 = smul.u32 2, %s23
          %s184 = ssub.s32 256, 256
          %185 = vsyncadd %s178, %s184
          %s186 = smul.addr %s182, 128
          %s187 = scalar_lea.hbm %s0, %s186
          %s188 = sshll.u32 %s181, 4
          %s189 = int_to_ptr.vmem [resolvable:$true] %s188
          %194 = dma.hbm_to_vmem [thread:$0]  %s187, 256, %s189, %s178, 128, 128, 8
        $region28: #{tpu_custom_call.1} parent=23 // pred_fallthru
          _
      $region24: #{tpu_custom_call.1} parent=5 // pred_fallthru
        _
      %p195 = scmp.le.s32.totalorder 1, %s16
      %p196 = scmp.lt.s32.totalorder %s16, 3
      %p197 = pnand %p195, %p196
      %p198 = pneg %p197
      // Predicated region
      $region29: #{tpu_custom_call.1} parent=5 // pred_check
        _
      $region30: #{tpu_custom_call.1} parent=5 // pred_check_branch
        %200 = sbr.rel (%p197) target = $region32
      $region31: #{tpu_custom_call.1} parent=5 // pred_region
        %s201 = ssub.s32 %s16, 1
        %s202 = sand.u32 %s41, 1
        %s203 = scalar_lea.sflag [#allocation3], %s202
        %s204 = sand.u32 %s41, 1
        %s205 = smul.addr %s204, 16
        %s206 = scalar_lea.vmem [#allocation2], %s205
        // Predicated region
        $region33: #{tpu_custom_call.1} parent=31 // pred_check
          %p207 = pneg %p54
        $region34: #{tpu_custom_call.1} parent=31 // pred_check_branch
          %209 = sbr.rel (%p207) target = $region36
        $region35: #{tpu_custom_call.1} parent=31 // pred_region
          %210 = dma.done %s203, 256
        $region36: #{tpu_custom_call.1} parent=31 // pred_fallthru
          _
        // Predicated region
        $region37: #{tpu_custom_call.1} parent=31 // pred_check
          %p211 = pneg %p80
        $region38: #{tpu_custom_call.1} parent=31 // pred_check_branch
          %213 = sbr.rel (%p211) target = $region40
        $region39: #{tpu_custom_call.1} parent=31 // pred_region
          %214 = dma.done [#allocation6], 2048
        $region40: #{tpu_custom_call.1} parent=31 // pred_fallthru
          _
        %s215 = sand.u32 %s41, 1
        %s216 = scalar_lea.sflag [#allocation3], %s215
        %s217 = sand.u32 %s41, 1
        %s218 = smul.addr %s217, 16
        %s219 = scalar_lea.vmem [#allocation2], %s218
        %p220 = pneg %p54
        %p221 = pneg %p51
        %p222 = pneg %p80
        %p223 = pneg %p77
        %p224 = scmp.lt.s32.totalorder %s26, 0
        %s225 = scalar_select %p224, %s26, 0
        %s226 = scalar_lea.vmem %s2, %s225
        %p227 = pneg %p106
        %p228 = pneg %p103
        %p229 = pneg %p134
        %p230 = pneg %p131
        %s231 = sand.u32 %s121, 1
        %s232 = scalar_lea.sflag [#allocation4], %s231
        %s233 = sand.u32 %s121, 1
        %s234 = smul.addr %s233, 16
        %s235 = scalar_lea.vmem [#allocation7], %s234
        %s236 = smul.u32 2, %s25
        %p237 = scmp.lt.s32.totalorder %s26, 0
        %s238 = scalar_select %p237, %s26, 0
        %s239 = scalar_lea.vmem %s2, %s238
        %s240 = smul.u32 2, %s25
        %v241 = vld [vmem:[%s206] sm:$0xff]
        %v242 = vld [vmem:[%s206 + $0x8] sm:$0xff]
        %v243 = vld [vmem:[#allocation5] sm:$0xff]
        %v244 = vld [vmem:[#allocation5 + $0x8] sm:$0xff]
        %v245 = vld [vmem:[#allocation5 + $0x10] sm:$0xff]
        %v246 = vld [vmem:[#allocation5 + $0x18] sm:$0xff]
        %v247 = vld [vmem:[#allocation5 + $0x20] sm:$0xff]
        %v248 = vld [vmem:[#allocation5 + $0x28] sm:$0xff]
        %v249 = vld [vmem:[#allocation5 + $0x30] sm:$0xff]
        %v250 = vld [vmem:[#allocation5 + $0x38] sm:$0xff]
        %v251 = vld [vmem:[#allocation5 + $0x40] sm:$0xff]
        %v252 = vld [vmem:[#allocation5 + $0x48] sm:$0xff]
        %v253 = vld [vmem:[#allocation5 + $0x50] sm:$0xff]
        %v254 = vld [vmem:[#allocation5 + $0x58] sm:$0xff]
        %v255 = vld [vmem:[#allocation5 + $0x60] sm:$0xff]
        %v256 = vld [vmem:[#allocation5 + $0x68] sm:$0xff]
        %v257 = vld [vmem:[#allocation5 + $0x70] sm:$0xff]
        %v258 = vld [vmem:[#allocation5 + $0x78] sm:$0xff]
        %v259 = vld [vmem:[%s239] sm:$0x1]
        %v261 = vlaneseq
        %v262 = vshrl.u32 %v261, 7
        %v263 = vsub.s32 0, %v262
        %v264 = vrot.slane %v259, %v263
        %266 = vmatprep.subr.mxu0 0.0
        %267 = vmatpush1.msra.mxu0 %v258
        %268 = vmatprep.subr.mxu0 0.0
        %269 = vmatpush1.msra.mxu0 %v257
        %270 = vmatprep.subr.mxu0 0.0
        %271 = vmatpush1.msra.mxu0 %v256
        %272 = vmatprep.subr.mxu0 0.0
        %273 = vmatpush1.msra.mxu0 %v255
        %274 = vmatprep.subr.mxu0 0.0
        %275 = vmatpush1.msra.mxu0 %v254
        %276 = vmatprep.subr.mxu0 0.0
        %277 = vmatpush1.msra.mxu0 %v253
        %278 = vmatprep.subr.mxu0 0.0
        %279 = vmatpush1.msra.mxu0 %v252
        %280 = vmatprep.subr.mxu0 0.0
        %281 = vmatpush1.msra.mxu0 %v251
        %282 = vmatprep.subr.mxu0 0.0
        %283 = vmatpush1.msra.mxu0 %v250
        %284 = vmatprep.subr.mxu0 0.0
        %285 = vmatpush1.msra.mxu0 %v249
        %286 = vmatprep.subr.mxu0 0.0
        %287 = vmatpush1.msra.mxu0 %v248
        %288 = vmatprep.subr.mxu0 0.0
        %289 = vmatpush1.msra.mxu0 %v247
        %290 = vmatprep.subr.mxu0 0.0
        %291 = vmatpush1.msra.mxu0 %v246
        %292 = vmatprep.subr.mxu0 0.0
        %293 = vmatpush1.msra.mxu0 %v245
        %294 = vmatprep.subr.mxu0 0.0
        %295 = vmatpush1.msra.mxu0 %v244
        %296 = vmatprep.subr.mxu0 0.0
        %297 = vmatpush1.msra.mxu0 %v243
        %298 = vmatprep.subr.mxu0 0.0
        %299 = vmatpush2.msra.mxu0 0.0
        %300 = vmatprep.subr.mxu0 0.0
        %301 = vmatpush2.msra.mxu0 0.0
        %302 = vmatprep.subr.mxu0 0.0
        %303 = vmatpush2.msra.mxu0 0.0
        %304 = vmatprep.subr.mxu0 0.0
        %305 = vmatpush2.msra.mxu0 0.0
        %306 = vmatprep.subr.mxu0 0.0
        %307 = vmatpush2.msra.mxu0 0.0
        %308 = vmatprep.subr.mxu0 0.0
        %309 = vmatpush2.msra.mxu0 0.0
        %310 = vmatprep.subr.mxu0 0.0
        %311 = vmatpush2.msra.mxu0 0.0
        %312 = vmatprep.subr.mxu0 0.0
        %313 = vmatpush2.msra.mxu0 0.0
        %314 = vmatprep.subr.mxu0 0.0
        %315 = vmatpush2.msra.mxu0 0.0
        %316 = vmatprep.subr.mxu0 0.0
        %317 = vmatpush2.msra.mxu0 0.0
        %318 = vmatprep.subr.mxu0 0.0
        %319 = vmatpush2.msra.mxu0 0.0
        %320 = vmatprep.subr.mxu0 0.0
        %321 = vmatpush2.msra.mxu0 0.0
        %322 = vmatprep.subr.mxu0 0.0
        %323 = vmatpush2.msra.mxu0 0.0
        %324 = vmatprep.subr.mxu0 0.0
        %325 = vmatpush2.msra.mxu0 0.0
        %326 = vmatprep.subr.mxu0 0.0
        %327 = vmatpush2.msra.mxu0 0.0
        %328 = vmatprep.subr.mxu0 0.0
        %329 = vmatpush2.msra.mxu0 0.0
        %330 = vmatprep.mubr.f32.mxu0 0.0
        %331 = vmatmul.mubr.f32.gmra.mxu0 %v241
        %v332 = vpop.f32.mrf.mxu0
        %v333 = vadd.f32 %v264, %v332
        %v334 = vpop.f32.mrf.mxu0
        %335 = vmatprep.mubr.f32.mxu0 0.0
        %336 = vmatmul.mubr.f32.gmra.mxu0 %v242
        %v337 = vpop.f32.mrf.mxu0
        %v338 = vadd.f32 %v264, %v337
        %v339 = vpop.f32.mrf.mxu0
        %340 = vdwg.mxu0
        %v341 = vxor.u32 %v333, 2147483648
        %v342 = vxor.u32 %v338, 2147483648
        %v343 = vmul.f32 %v341, 1.442695
        %v344 = vpow.pop %v343
        %v345 = vmul.f32 %v342, 1.442695
        %v346 = vpow.pop %v345
        %v347 = vadd.f32 %v344, 1.0
        %v348 = vadd.f32 %v346, 1.0
        %v349 = vrcp.pop %v347
        %v350 = vmul.f32 1.0, %v349
        %v351 = vrcp.pop %v348
        %v352 = vmul.f32 1.0, %v351
        %v353 = vmul.f32 %v241, %v350
        %v354 = vmul.f32 %v242, %v352
        %355 = vst [vmem:[%s235] sm:$0xff] %v353
        %356 = vst [vmem:[%s235 + $0x8] sm:$0xff] %v354
        %s357 = sand.u32 %s121, 1
        %s358 = scalar_lea.sflag [#allocation4], %s357
        %s359 = sand.u32 %s121, 1
        %s360 = smul.addr %s359, 16
        %s361 = scalar_lea.vmem [#allocation7], %s360
        // Predicated region
        $region41: #{tpu_custom_call.1} parent=31 // pred_check
          %p362 = pneg %p131
        $region42: #{tpu_custom_call.1} parent=31 // pred_check_branch
          %364 = sbr.rel (%p362) target = $region44
        $region43: #{tpu_custom_call.1} parent=31 // pred_region
          %s365 = smul.u32 2, %s25
          %s367 = ssub.s32 256, 256
          %368 = vsyncadd %s358, %s367
          %s369 = sadd.s32 %s26, %s365
          %s370 = smul.addr %s369, 128
          %s371 = scalar_lea.hbm %s3, %s370
          %s372 = sshll.u32 %s361, 4
          %s373 = int_to_ptr.vmem [resolvable:$true] %s372
          %378 = dma.vmem_to_hbm [thread:$0]  %s373, 256, %s371, %s358, 128, 128, 8
        $region44: #{tpu_custom_call.1} parent=31 // pred_fallthru
          _
      $region32: #{tpu_custom_call.1} parent=5 // pred_fallthru
        _
      %p379 = scmp.le.s32.totalorder 2, %s16
      // Predicated region
      $region45: #{tpu_custom_call.1} parent=5 // pred_check
        %p380 = pneg %p379
      $region46: #{tpu_custom_call.1} parent=5 // pred_check_branch
        %382 = sbr.rel (%p380) target = $region48
      $region47: #{tpu_custom_call.1} parent=5 // pred_region
        %s383 = ssub.s32 %s16, 2
        // Predicated region
        $region49: #{tpu_custom_call.1} parent=47 // pred_check
          %p384 = pneg %p137
        $region50: #{tpu_custom_call.1} parent=47 // pred_check_branch
          %386 = sbr.rel (%p384) target = $region52
        $region51: #{tpu_custom_call.1} parent=47 // pred_region
          %s387 = sand.u32 %s122, 1
          %s388 = scalar_lea.sflag [#allocation4], %s387
          %s389 = sand.u32 %s122, 1
          %s390 = smul.addr %s389, 16
          %s391 = scalar_lea.vmem [#allocation7], %s390
          %392 = dma.done %s388, 256
        $region52: #{tpu_custom_call.1} parent=47 // pred_fallthru
          _
      $region48: #{tpu_custom_call.1} parent=5 // pred_fallthru
        _
    $region6: #{tpu_custom_call.1} parent=1 // loop_footer
      %s20 = sadd.s32 1, %s16
    $region7: #{tpu_custom_call.1} parent=1 // loop_footer_branch
      %15 = sbr.rel target = $region3
    $region8: #{tpu_custom_call.1} parent=1 // loop_exit
      _
    %393 = vsyncpa [#allocation3], 1
    %s394 = scalar_lea.sflag [#allocation3], 1
    %395 = vsyncpa %s394, 1
    %396 = vsyncpa [#allocation6], 1
    %397 = vsyncpa [#allocation4], 1
    %s398 = scalar_lea.sflag [#allocation4], 1
    %399 = vsyncpa %s398, 1

// kernel: tpu_custom_call.1
$region0: #{tpu_custom_call.1}
  #allocation0 [shape = 'u32[]', space=smem, size = 0x4, offset = 0x4, fixed_abs, tag = 'smem constant byte address 0x4 - core index']
  #allocation1 [shape = 'u32[144,128]{1,0:T(1,128)}', space=vmem, size = 0x12000, scoped, tag = 'internal scratch']
  %s0 = inlined_call_operand.hbm [shape: f32[32,128], index: 0, kind: input, shape index: {}]
  %s1 = inlined_call_operand.hbm [shape: f32[128,128], index: 1, kind: input, shape index: {}]
  %s2 = inlined_call_operand.vmem [shape: f32[1,128], index: 2, kind: input, shape index: {}]
  %s3 = inlined_call_operand.hbm [shape: f32[32,128], index: 3, kind: output, shape index: {}]
  %s4 = sld [smem:[#allocation0]]
  $region53: #{tpu_custom_call.1} parent=0
    _
  %s6 = ssub.s32 1, %s4
  %s7 = scalar_select 0, %s6, %s4
  $region1: #{tpu_custom_call.1} parent=0
    #allocation2 [shape = 'u8[16384]{0}', space=vmem, size = 0x4000, scoped, tag = 'input window, operand 0']
    #allocation3 [shape = 's32[2]{0}', space=sflag, size = 0x8, scoped, tag = 'scoped memory for tpu_custom_call.1']
    #allocation4 [shape = 's32[2]{0}', space=sflag, size = 0x8, scoped, tag = 'scoped memory for tpu_custom_call.1']
    #allocation5 [shape = 'u8[65536]{0}', space=vmem, size = 0x10000, scoped, tag = 'input window, operand 1, single buffered']
    #allocation6 [shape = 's32[1]{0}', space=sflag, size = 0x4, scoped, tag = 'scoped memory for tpu_custom_call.1']
    #allocation7 [shape = 'u8[16384]{0}', space=vmem, size = 0x4000, scoped, tag = 'output window, operand 0']
    %8 = vsyncpa [#allocation3], 0
    %s9 = scalar_lea.sflag [#allocation3], 1
    %10 = vsyncpa %s9, 0
    %11 = vsyncpa [#allocation6], 0
    %12 = vsyncpa [#allocation4], 0
    %s13 = scalar_lea.sflag [#allocation4], 1
    %14 = vsyncpa %s13, 0
    loop: start=0, step=1, limit=4
    $region2: #{tpu_custom_call.1} parent=1 // loop_pre_header
      _
    $region3: #{tpu_custom_call.1} parent=1 // loop_header
      %s16 = sphi 0, %s20
      %p17 = scmp.ge.s32.totalorder %s16, 4
      %s23 = sphi 0, %s35
      %s24 = sphi 0, %s31
      %s25 = sphi 0, %s23
      %s26 = sphi 0, %s24
      %s27 = sphi 0, %s25
      %s28 = sphi 0, %s26
      %s38 = sphi 0, %s40
      %s41 = sphi 0, %s38
      %s42 = sphi 0, %s41
      %s58 = sphi 0, %s42
      %s64 = sphi 0, %s66
      %s67 = sphi 0, %s64
      %s68 = sphi 0, %s67
      %s84 = sphi 0, %s68
      %s90 = sphi 0, %s92
      %s93 = sphi 0, %s90
      %s94 = sphi 0, %s93
      %s110 = sphi 0, %s94
      %s118 = sphi 0, %s120
      %s121 = sphi 0, %s118
      %s122 = sphi 0, %s121
      %s138 = sphi 0, %s122
    $region4: #{tpu_custom_call.1} parent=1 // loop_header_branch
      %19 = sbr.rel (%p17) target = $region8
    $region5: #{tpu_custom_call.1} parent=1 // loop_body
      %s21 = ssub.s32 %s16, 1
      %s22 = ssub.s32 %s16, 2
      %s29 = sadd.s32 1, %s24
      %p30 = scmp.ge.s32.totalorder %s29, 1
      %s31 = scalar_select %p30, 0, %s29
      %s32 = sadd.s32 1, %s23
      %s33 = scalar_select %p30, %s32, %s23
      %p34 = scmp.ge.s32.totalorder %s33, 2
      %s35 = scalar_select %p34, 0, %s33
      %s36 = ssub.s32 %s23, %s35
      %p37 = scmp.eq.s32.totalorder %s36, 0
      %s39 = sadd.s32 %s38, 1
      %s40 = scalar_select %p37, %s38, %s39
      %p43 = pneg %p37
      %p44 = scmp.eq.s32.totalorder %s16, 1
      %p45 = por %p43, %p44
      %p46 = scmp.ne.s32.totalorder %s38, %s41
      %p47 = scmp.eq.s32.totalorder %s16, 0
      %p48 = por %p46, %p47
      %p49 = scmp.ne.s32.totalorder %s38, %s41
      %p50 = scmp.eq.s32.totalorder %s21, 1
      %p51 = por %p49, %p50
      %p52 = scmp.ne.s32.totalorder %s41, %s42
      %p53 = scmp.eq.s32.totalorder %s21, 0
      %p54 = por %p52, %p53
      %p55 = scmp.ne.s32.totalorder %s41, %s42
      %p56 = scmp.eq.s32.totalorder %s22, 1
      %p57 = por %p55, %p56
      %p59 = scmp.ne.s32.totalorder %s42, %s58
      %p60 = scmp.eq.s32.totalorder %s22, 0
      %p61 = por %p59, %p60
      %s62 = ssub.s32 %s24, %s31
      %p63 = scmp.eq.s32.totalorder %s62, 0
      %s65 = sadd.s32 %s64, 1
      %s66 = scalar_select %p63, %s64, %s65
      %p69 = pneg %p63
      %p70 = scmp.eq.s32.totalorder %s16, 1
      %p71 = por %p69, %p70
      %p72 = scmp.ne.s32.totalorder %s64, %s67
      %p73 = scmp.eq.s32.totalorder %s16, 0
      %p74 = por %p72, %p73
      %p75 = scmp.ne.s32.totalorder %s64, %s67
      %p76 = scmp.eq.s32.totalorder %s21, 1
      %p77 = por %p75, %p76
      %p78 = scmp.ne.s32.totalorder %s67, %s68
      %p79 = scmp.eq.s32.totalorder %s21, 0
      %p80 = por %p78, %p79
      %p81 = scmp.ne.s32.totalorder %s67, %s68
      %p82 = scmp.eq.s32.totalorder %s22, 1
      %p83 = por %p81, %p82
      %p85 = scmp.ne.s32.totalorder %s68, %s84
      %p86 = scmp.eq.s32.totalorder %s22, 0
      %p87 = por %p85, %p86
      %s88 = ssub.s32 %s24, %s31
      %p89 = scmp.eq.s32.totalorder %s88, 0
      %s91 = sadd.s32 %s90, 1
      %s92 = scalar_select %p89, %s90, %s91
      %p95 = pneg %p89
      %p96 = scmp.eq.s32.totalorder %s16, 1
      %p97 = por %p95, %p96
      %p98 = scmp.ne.s32.totalorder %s90, %s93
      %p99 = scmp.eq.s32.totalorder %s16, 0
      %p100 = por %p98, %p99
      %p101 = scmp.ne.s32.totalorder %s90, %s93
      %p102 = scmp.eq.s32.totalorder %s21, 1
      %p103 = por %p101, %p102
      %p104 = scmp.ne.s32.totalorder %s93, %s94
      %p105 = scmp.eq.s32.totalorder %s21, 0
      %p106 = por %p104, %p105
      %p107 = scmp.ne.s32.totalorder %s93, %s94
      %p108 = scmp.eq.s32.totalorder %s22, 1
      %p109 = por %p107, %p108
      %p111 = scmp.ne.s32.totalorder %s94, %s110
      %p112 = scmp.eq.s32.totalorder %s22, 0
      %p113 = por %p111, %p112
      %s114 = ssub.s32 %s23, %s35
      %s115 = ssub.s32 %s24, %s31
      %s116 = sor.u32 %s114, %s115
      %p117 = scmp.eq.s32.totalorder %s116, 0
      %s119 = sadd.s32 %s118, 1
      %s120 = scalar_select %p117, %s118, %s119
      %p123 = pneg %p117
      %p124 = scmp.eq.s32.totalorder %s16, 1
      %p125 = por %p123, %p124
      %p126 = scmp.ne.s32.totalorder %s118, %s121
      %p127 = scmp.eq.s32.totalorder %s16, 0
      %p128 = por %p126, %p127
      %p129 = scmp.ne.s32.totalorder %s118, %s121
      %p130 = scmp.eq.s32.totalorder %s21, 1
      %p131 = por %p129, %p130
      %p132 = scmp.ne.s32.totalorder %s121, %s122
      %p133 = scmp.eq.s32.totalorder %s21, 0
      %p134 = por %p132, %p133
      %p135 = scmp.ne.s32.totalorder %s121, %s122
      %p136 = scmp.eq.s32.totalorder %s22, 1
      %p137 = por %p135, %p136
      %p139 = scmp.ne.s32.totalorder %s122, %s138
      %p140 = scmp.eq.s32.totalorder %s22, 0
      %p141 = por %p139, %p140
      %p142 = scmp.le.s32.totalorder 1, %s16
      %p143 = scmp.lt.s32.totalorder %s16, 3
      %p144 = pnand %p142, %p143
      %p145 = pneg %p144
      // Predicated region
      $region9: #{tpu_custom_call.1} parent=5 // pred_check
        _
      $region10: #{tpu_custom_call.1} parent=5 // pred_check_branch
        %147 = sbr.rel (%p144) target = $region12
      $region11: #{tpu_custom_call.1} parent=5 // pred_region
        %s148 = ssub.s32 %s16, 1
        // Predicated region
        $region13: #{tpu_custom_call.1} parent=11 // pred_check
          %p149 = pneg %p80
        $region14: #{tpu_custom_call.1} parent=11 // pred_check_branch
          %151 = sbr.rel (%p149) target = $region16
        $region15: #{tpu_custom_call.1} parent=11 // pred_region
          %s153 = ssub.s32 2048, 2048
          %154 = vsyncadd [#allocation6], %s153
          %s155 = smul.addr %s26, 128
          %s156 = scalar_lea.hbm %s1, %s155
          %s157 = sshll.u32 [#allocation5], 4
          %s158 = int_to_ptr.vmem [resolvable:$true] %s157
          %163 = dma.hbm_to_vmem [thread:$0]  %s156, 2048, %s158, [#allocation6], 128, 128, 8
        $region16: #{tpu_custom_call.1} parent=11 // pred_fallthru
          _
        // Predicated region
        $region17: #{tpu_custom_call.1} parent=11 // pred_check
          %p164 = pneg %p106
        $region18: #{tpu_custom_call.1} parent=11 // pred_check_branch
          %166 = sbr.rel (%p164) target = $region20
        $region19: #{tpu_custom_call.1} parent=11 // pred_region
          %p167 = scmp.lt.s32.totalorder %s26, 0
          %s168 = scalar_select %p167, %s26, 0
          %s169 = scalar_lea.vmem %s2, %s168
        $region20: #{tpu_custom_call.1} parent=11 // pred_fallthru
          _
      $region12: #{tpu_custom_call.1} parent=5 // pred_fallthru
        _
      %p170 = scmp.lt.s32.totalorder %s16, 2
      // Predicated region
      $region21: #{tpu_custom_call.1} parent=5 // pred_check
        %p171 = pneg %p170
      $region22: #{tpu_custom_call.1} parent=5 // pred_check_branch
        %173 = sbr.rel (%p171) target = $region24
      $region23: #{tpu_custom_call.1} parent=5 // pred_region
        // Predicated region
        $region25: #{tpu_custom_call.1} parent=23 // pred_check
          %p174 = pneg %p48
        $region26: #{tpu_custom_call.1} parent=23 // pred_check_branch
          %176 = sbr.rel (%p174) target = $region28
        $region27: #{tpu_custom_call.1} parent=23 // pred_region
          %s177 = sand.u32 %s38, 1
          %s178 = scalar_lea.sflag [#allocation3], %s177
          %s179 = sand.u32 %s38, 1
          %s180 = smul.addr %s179, 16
          %s181 = scalar_lea.vmem [#allocation2], %s180
          %s182 = smul.u32 2, %s23
          %s184 = ssub.s32 256, 256
          %185 = vsyncadd %s178, %s184
          %s186 = smul.addr %s182, 128
          %s187 = scalar_lea.hbm %s0, %s186
          %s188 = sshll.u32 %s181, 4
          %s189 = int_to_ptr.vmem [resolvable:$true] %s188
          %194 = dma.hbm_to_vmem [thread:$0]  %s187, 256, %s189, %s178, 128, 128, 8
        $region28: #{tpu_custom_call.1} parent=23 // pred_fallthru
          _
      $region24: #{tpu_custom_call.1} parent=5 // pred_fallthru
        _
      %p195 = scmp.le.s32.totalorder 1, %s16
      %p196 = scmp.lt.s32.totalorder %s16, 3
      %p197 = pnand %p195, %p196
      %p198 = pneg %p197
      // Predicated region
      $region29: #{tpu_custom_call.1} parent=5 // pred_check
        _
      $region30: #{tpu_custom_call.1} parent=5 // pred_check_branch
        %200 = sbr.rel (%p197) target = $region32
      $region31: #{tpu_custom_call.1} parent=5 // pred_region
        %s201 = ssub.s32 %s16, 1
        %s202 = sand.u32 %s41, 1
        %s203 = scalar_lea.sflag [#allocation3], %s202
        %s204 = sand.u32 %s41, 1
        %s205 = smul.addr %s204, 16
        %s206 = scalar_lea.vmem [#allocation2], %s205
        // Predicated region
        $region33: #{tpu_custom_call.1} parent=31 // pred_check
          %p207 = pneg %p54
        $region34: #{tpu_custom_call.1} parent=31 // pred_check_branch
          %209 = sbr.rel (%p207) target = $region36
        $region35: #{tpu_custom_call.1} parent=31 // pred_region
          %210 = dma.done %s203, 256
        $region36: #{tpu_custom_call.1} parent=31 // pred_fallthru
          _
        // Predicated region
        $region37: #{tpu_custom_call.1} parent=31 // pred_check
          %p211 = pneg %p80
        $region38: #{tpu_custom_call.1} parent=31 // pred_check_branch
          %213 = sbr.rel (%p211) target = $region40
        $region39: #{tpu_custom_call.1} parent=31 // pred_region
          %214 = dma.done [#allocation6], 2048
        $region40: #{tpu_custom_call.1} parent=31 // pred_fallthru
          _
        %s215 = sand.u32 %s41, 1
        %s216 = scalar_lea.sflag [#allocation3], %s215
        %s217 = sand.u32 %s41, 1
        %s218 = smul.addr %s217, 16
        %s219 = scalar_lea.vmem [#allocation2], %s218
        %p220 = pneg %p54
        %p221 = pneg %p51
        %p222 = pneg %p80
        %p223 = pneg %p77
        %p224 = scmp.lt.s32.totalorder %s26, 0
        %s225 = scalar_select %p224, %s26, 0
        %s226 = scalar_lea.vmem %s2, %s225
        %p227 = pneg %p106
        %p228 = pneg %p103
        %p229 = pneg %p134
        %p230 = pneg %p131
        %s231 = sand.u32 %s121, 1
        %s232 = scalar_lea.sflag [#allocation4], %s231
        %s233 = sand.u32 %s121, 1
        %s234 = smul.addr %s233, 16
        %s235 = scalar_lea.vmem [#allocation7], %s234
        %s236 = smul.u32 2, %s25
        %p237 = scmp.lt.s32.totalorder %s26, 0
        %s238 = scalar_select %p237, %s26, 0
        %s239 = scalar_lea.vmem %s2, %s238
        %s240 = smul.u32 2, %s25
        %v241 = vld [vmem:[%s206] sm:$0xff]
        %v242 = vld [vmem:[%s206 + $0x8] sm:$0xff]
        %v243 = vld [vmem:[#allocation5] sm:$0xff]
        %v244 = vld [vmem:[#allocation5 + $0x8] sm:$0xff]
        %v245 = vld [vmem:[#allocation5 + $0x10] sm:$0xff]
        %v246 = vld [vmem:[#allocation5 + $0x18] sm:$0xff]
        %v247 = vld [vmem:[#allocation5 + $0x20] sm:$0xff]
        %v248 = vld [vmem:[#allocation5 + $0x28] sm:$0xff]
        %v249 = vld [vmem:[#allocation5 + $0x30] sm:$0xff]
        %v250 = vld [vmem:[#allocation5 + $0x38] sm:$0xff]
        %v251 = vld [vmem:[#allocation5 + $0x40] sm:$0xff]
        %v252 = vld [vmem:[#allocation5 + $0x48] sm:$0xff]
        %v253 = vld [vmem:[#allocation5 + $0x50] sm:$0xff]
        %v254 = vld [vmem:[#allocation5 + $0x58] sm:$0xff]
        %v255 = vld [vmem:[#allocation5 + $0x60] sm:$0xff]
        %v256 = vld [vmem:[#allocation5 + $0x68] sm:$0xff]
        %v257 = vld [vmem:[#allocation5 + $0x70] sm:$0xff]
        %v258 = vld [vmem:[#allocation5 + $0x78] sm:$0xff]
        %v259 = vld [vmem:[%s239] sm:$0x1]
        %v261 = vlaneseq
        %v262 = vshrl.u32 %v261, 7
        %v263 = vsub.s32 0, %v262
        %v264 = vrot.slane %v259, %v263
        %266 = vmatprep.subr.mxu0 0.0
        %267 = vmatpush1.msra.mxu0 %v258
        %268 = vmatprep.subr.mxu0 0.0
        %269 = vmatpush1.msra.mxu0 %v257
        %270 = vmatprep.subr.mxu0 0.0
        %271 = vmatpush1.msra.mxu0 %v256
        %272 = vmatprep.subr.mxu0 0.0
        %273 = vmatpush1.msra.mxu0 %v255
        %274 = vmatprep.subr.mxu0 0.0
        %275 = vmatpush1.msra.mxu0 %v254
        %276 = vmatprep.subr.mxu0 0.0
        %277 = vmatpush1.msra.mxu0 %v253
        %278 = vmatprep.subr.mxu0 0.0
        %279 = vmatpush1.msra.mxu0 %v252
        %280 = vmatprep.subr.mxu0 0.0
        %281 = vmatpush1.msra.mxu0 %v251
        %282 = vmatprep.subr.mxu0 0.0
        %283 = vmatpush1.msra.mxu0 %v250
        %284 = vmatprep.subr.mxu0 0.0
        %285 = vmatpush1.msra.mxu0 %v249
        %286 = vmatprep.subr.mxu0 0.0
        %287 = vmatpush1.msra.mxu0 %v248
        %288 = vmatprep.subr.mxu0 0.0
        %289 = vmatpush1.msra.mxu0 %v247
        %290 = vmatprep.subr.mxu0 0.0
        %291 = vmatpush1.msra.mxu0 %v246
        %292 = vmatprep.subr.mxu0 0.0
        %293 = vmatpush1.msra.mxu0 %v245
        %294 = vmatprep.subr.mxu0 0.0
        %295 = vmatpush1.msra.mxu0 %v244
        %296 = vmatprep.subr.mxu0 0.0
        %297 = vmatpush1.msra.mxu0 %v243
        %298 = vmatprep.subr.mxu0 0.0
        %299 = vmatpush2.msra.mxu0 0.0
        %300 = vmatprep.subr.mxu0 0.0
        %301 = vmatpush2.msra.mxu0 0.0
        %302 = vmatprep.subr.mxu0 0.0
        %303 = vmatpush2.msra.mxu0 0.0
        %304 = vmatprep.subr.mxu0 0.0
        %305 = vmatpush2.msra.mxu0 0.0
        %306 = vmatprep.subr.mxu0 0.0
        %307 = vmatpush2.msra.mxu0 0.0
        %308 = vmatprep.subr.mxu0 0.0
        %309 = vmatpush2.msra.mxu0 0.0
        %310 = vmatprep.subr.mxu0 0.0
        %311 = vmatpush2.msra.mxu0 0.0
        %312 = vmatprep.subr.mxu0 0.0
        %313 = vmatpush2.msra.mxu0 0.0
        %314 = vmatprep.subr.mxu0 0.0
        %315 = vmatpush2.msra.mxu0 0.0
        %316 = vmatprep.subr.mxu0 0.0
        %317 = vmatpush2.msra.mxu0 0.0
        %318 = vmatprep.subr.mxu0 0.0
        %319 = vmatpush2.msra.mxu0 0.0
        %320 = vmatprep.subr.mxu0 0.0
        %321 = vmatpush2.msra.mxu0 0.0
        %322 = vmatprep.subr.mxu0 0.0
        %323 = vmatpush2.msra.mxu0 0.0
        %324 = vmatprep.subr.mxu0 0.0
        %325 = vmatpush2.msra.mxu0 0.0
        %326 = vmatprep.subr.mxu0 0.0
        %327 = vmatpush2.msra.mxu0 0.0
        %328 = vmatprep.subr.mxu0 0.0
        %329 = vmatpush2.msra.mxu0 0.0
        %330 = vmatprep.mubr.f32.mxu0 0.0
        %331 = vmatmul.mubr.f32.gmra.mxu0 %v241
        %v332 = vpop.f32.mrf.mxu0
        %v333 = vadd.f32 %v264, %v332
        %v334 = vpop.f32.mrf.mxu0
        %335 = vmatprep.mubr.f32.mxu0 0.0
        %336 = vmatmul.mubr.f32.gmra.mxu0 %v242
        %v337 = vpop.f32.mrf.mxu0
        %v338 = vadd.f32 %v264, %v337
        %v339 = vpop.f32.mrf.mxu0
        %340 = vdwg.mxu0
        %v341 = vxor.u32 %v333, 2147483648
        %v342 = vxor.u32 %v338, 2147483648
        %v343 = vmul.f32 %v341, 1.442695
        %v344 = vpow.pop %v343
        %v345 = vmul.f32 %v342, 1.442695
        %v346 = vpow.pop %v345
        %v347 = vadd.f32 %v344, 1.0
        %v348 = vadd.f32 %v346, 1.0
        %v349 = vrcp.pop %v347
        %v350 = vmul.f32 1.0, %v349
        %v351 = vrcp.pop %v348
        %v352 = vmul.f32 1.0, %v351
        %v353 = vmul.f32 %v241, %v350
        %v354 = vmul.f32 %v242, %v352
        %355 = vst [vmem:[%s235] sm:$0xff] %v353
        %356 = vst [vmem:[%s235 + $0x8] sm:$0xff] %v354
        %s357 = sand.u32 %s121, 1
        %s358 = scalar_lea.sflag [#allocation4], %s357
        %s359 = sand.u32 %s121, 1
        %s360 = smul.addr %s359, 16
        %s361 = scalar_lea.vmem [#allocation7], %s360
        // Predicated region
        $region41: #{tpu_custom_call.1} parent=31 // pred_check
          %p362 = pneg %p131
        $region42: #{tpu_custom_call.1} parent=31 // pred_check_branch
          %364 = sbr.rel (%p362) target = $region44
        $region43: #{tpu_custom_call.1} parent=31 // pred_region
          %s365 = smul.u32 2, %s25
          %s367 = ssub.s32 256, 256
          %368 = vsyncadd %s358, %s367
          %s369 = sadd.s32 %s26, %s365
          %s370 = smul.addr %s369, 128
          %s371 = scalar_lea.hbm %s3, %s370
          %s372 = sshll.u32 %s361, 4
          %s373 = int_to_ptr.vmem [resolvable:$true] %s372
          %378 = dma.vmem_to_hbm [thread:$0]  %s373, 256, %s371, %s358, 128, 128, 8
        $region44: #{tpu_custom_call.1} parent=31 // pred_fallthru
          _
      $region32: #{tpu_custom_call.1} parent=5 // pred_fallthru
        _
      %p379 = scmp.le.s32.totalorder 2, %s16
      // Predicated region
      $region45: #{tpu_custom_call.1} parent=5 // pred_check
        %p380 = pneg %p379
      $region46: #{tpu_custom_call.1} parent=5 // pred_check_branch
        %382 = sbr.rel (%p380) target = $region48
      $region47: #{tpu_custom_call.1} parent=5 // pred_region
        %s383 = ssub.s32 %s16, 2
        // Predicated region
        $region49: #{tpu_custom_call.1} parent=47 // pred_check
          %p384 = pneg %p137
        $region50: #{tpu_custom_call.1} parent=47 // pred_check_branch
          %386 = sbr.rel (%p384) target = $region52
        $region51: #{tpu_custom_call.1} parent=47 // pred_region
          %s387 = sand.u32 %s122, 1
          %s388 = scalar_lea.sflag [#allocation4], %s387
          %s389 = sand.u32 %s122, 1
          %s390 = smul.addr %s389, 16
          %s391 = scalar_lea.vmem [#allocation7], %s390
          %392 = dma.done %s388, 256
        $region52: #{tpu_custom_call.1} parent=47 // pred_fallthru
          _
      $region48: #{tpu_custom_call.1} parent=5 // pred_fallthru
        _
    $region6: #{tpu_custom_call.1} parent=1 // loop_footer
      %s20 = sadd.s32 1, %s16
    $region7: #{tpu_custom_call.1} parent=1 // loop_footer_branch
      %15 = sbr.rel target = $region3
    $region8: #{tpu_custom_call.1} parent=1 // loop_exit
      _
    %393 = vsyncpa [#allocation3], 1
    %s394 = scalar_lea.sflag [#allocation3], 1
    %395 = vsyncpa %s394, 1
    %396 = vsyncpa [#allocation6], 1
    %397 = vsyncpa [#allocation4], 1
    %s398 = scalar_lea.sflag [#allocation4], 1
    %399 = vsyncpa %s398, 1

</llo_original>
